<compile_context>
chip_gen: v7x
topology: tpu7x:2x2x1
jax: 0.10.0
libtpu: 0.0.40
codegen_flags: <defaults>
</compile_context>

<pallas_src>
import functools

import jax
import jax.numpy as jnp
from jax.experimental import pallas as pl
from jax.experimental.pallas import tpu as pltpu

EPS = 1e-5
LANE = 128
SUB = 8


def _rup(n, m):
    return ((n + m - 1) // m) * m


def _pad2d(a, rows, cols):
    return jnp.pad(a, ((0, rows - a.shape[0]), (0, cols - a.shape[1])))


def _elementwise_dtype():
    """bf16 activation chain on chips with a bf16 VPU (v6e/v7x); f32 otherwise."""
    try:
        kind = jax.devices()[0].device_kind.lower()
    except Exception:
        return jnp.bfloat16
    if any(t in kind for t in ("v2", "v3", "v4", "v5")):
        return jnp.float32
    return jnp.bfloat16


# ---------------------------------------------------------------------------
# Kernel
# ---------------------------------------------------------------------------
def dnn_kernel(x_ref,
               w1, b1, w2, b2, w3, b3, w4, b4, w5, b5,
               out_ref, *, act_dtype):
    """One batch tile: 5 (BN-folded) Linear layers, ReLU on layers 1-4."""

    def lin(h, w_ref, b_ref, relu):
        # bf16 at the MXU inputs, f32 accumulation, f32 bias add.
        z = jnp.dot(h.astype(jnp.bfloat16), w_ref[...],
                    preferred_element_type=jnp.float32) + b_ref[...]
        if relu:
            # Inter-layer activations carried in act_dtype (bf16 on v6e/v7x).
            return jnp.maximum(z, 0.0).astype(act_dtype)
        return z

    h = x_ref[...]
    h = lin(h, w1, b1, True)
    h = lin(h, w2, b2, True)
    h = lin(h, w3, b3, True)
    h = lin(h, w4, b4, True)
    # nn.Dropout(0.5) -> identity in eval mode.
    out_ref[...] = lin(h, w5, b5, False).astype(out_ref.dtype)


# ---------------------------------------------------------------------------
# Parameter folding / padding
# ---------------------------------------------------------------------------
def _fold_bn(params):
    """Fold eval-mode BatchNorm1d into the preceding Linear."""
    folded = {}
    for i in (1, 2, 3, 4):
        s = params[f"g{i}"] * jax.lax.rsqrt(params[f"var{i}"] + EPS)        # [1, h]
        folded[f"w{i}"] = params[f"w{i}"] * s                                # [in, h]
        folded[f"b{i}"] = (params[f"b{i}"] - params[f"mean{i}"]) * s + params[f"beta{i}"]
    folded["w5"] = params["w5"]
    folded["b5"] = params["b5"]
    return folded


def _pick_tiling(B, tb):
    """Pad batch only to the sublane (8); pick tb to minimize padding waste."""
    b8 = _rup(B, SUB)
    if tb is None:
        if b8 <= 256:
            tb = b8                                    # one tile, minimal padding
        else:
            target = 512 if b8 >= 1024 else 256        # >=2 tiles -> v7x megacore
            n_tiles = -(-b8 // target)
            tb = _rup(-(-b8 // n_tiles), 16)           # 16: bf16 sublane packing
    tb = max(SUB, _rup(min(tb, b8), SUB))
    b_pad = _rup(b8, tb)
    return tb, b_pad


def _prepare(x, params, tb):
    """Flatten + fold BN + pad batch/output minimally; keep native feature dims."""
    B = x.shape[0]
    x2d = x.reshape(B, -1)
    n_feature = x2d.shape[1]
    n_output = params["w5"].shape[1]

    folded = _fold_bn(params)
    dims = [n_feature] + [folded[f"w{i}"].shape[1] for i in (1, 2, 3, 4, 5)]
    # Native (unpadded) input/hidden dims; only the HBM-facing output is padded
    # to a lane-dense 128 so the final store is unmasked.
    pdims = list(dims)
    pdims[5] = _rup(dims[5], LANE)

    tb, b_pad = _pick_tiling(B, tb)

    x_p = _pad2d(x2d.astype(jnp.bfloat16), b_pad, pdims[0])   # bf16 x: half the DMA
    wbs = []
    for i in range(1, 6):
        w = _pad2d(folded[f"w{i}"], pdims[i - 1], pdims[i]).astype(jnp.bfloat16)
        b = _pad2d(folded[f"b{i}"], 1, pdims[i]).astype(jnp.float32)
        wbs += [w, b]
    return x_p, wbs, pdims, B, b_pad, tb, n_output


# ---------------------------------------------------------------------------
# Wrapper
# ---------------------------------------------------------------------------
def dnn_forward(x, params, *, tb=None):
    """x: [B, ...] (flattened inside, like x.view(B, -1)); params: dict."""
    x_p, wbs, pdims, B, b_pad, tb, n_output = _prepare(x, params, tb)
    grid = (b_pad // tb,)
    act_dtype = _elementwise_dtype()

    in_specs = [pl.BlockSpec((tb, pdims[0]), lambda i: (i, 0))]        # x: batch-tiled
    for li in range(5):
        kin, kout = pdims[li], pdims[li + 1]
        # Grid-invariant weights/biases stay resident in VMEM across batch tiles.
        # TODO(synk): at much larger hidden dims, single-buffer these
        #             (pipeline_mode=pl.Buffered(1)) or pipeline weights per layer
        #             with pltpu.emit_pipeline instead of keeping all resident.
        in_specs.append(pl.BlockSpec((kin, kout), lambda i: (0, 0)))   # weight
        in_specs.append(pl.BlockSpec((1, kout), lambda i: (0, 0)))     # bias
    out_specs = pl.BlockSpec((tb, pdims[5]), lambda i: (i, 0))         # lane-dense out

    # Advisory cost estimate for XLA scheduling.
    flops = 2 * b_pad * sum(pdims[i] * pdims[i + 1] for i in range(5))
    weight_bytes = sum(pdims[i] * pdims[i + 1] * 2 + pdims[i + 1] * 4 for i in range(5))
    io_bytes = x_p.size * 2 + b_pad * pdims[5] * 4
    cost = pl.CostEstimate(flops=flops, transcendentals=0,
                           bytes_accessed=weight_bytes + io_bytes)

    # VMEM budget from actual need (double-buffered weights + x/out tiles +
    # activation headroom) + 8 MiB scratch headroom; capped at 48 MiB for v7x.
    need = 2 * weight_bytes
    need += 2 * tb * (pdims[0] * 2 + pdims[5] * 4)     # x / out double buffers
    need += 4 * tb * max(pdims) * 4                    # f32 accum / activations
    vmem_limit = int(min(need + (8 << 20), 48 << 20))

    out_p = pl.pallas_call(
        functools.partial(dnn_kernel, act_dtype=act_dtype),
        out_shape=jax.ShapeDtypeStruct((b_pad, pdims[5]), jnp.float32),
        grid=grid,
        in_specs=in_specs,
        out_specs=out_specs,
        compiler_params=pltpu.CompilerParams(
            dimension_semantics=("parallel",),   # shard batch tiles across v7x's 2 TCs
            vmem_limit_bytes=vmem_limit),
        cost_estimate=cost,
    )(x_p, *wbs)
    return out_p[:B, :n_output]


# ---------------------------------------------------------------------------
# Parameters & references
# ---------------------------------------------------------------------------
def init_params(key, n_feature, n_h1, n_h2, n_h3, n_h4, n_output):
    """Deterministic synthetic parameters (PyTorch-Linear-style uniform init)."""
    dims = [n_feature, n_h1, n_h2, n_h3, n_h4, n_output]
    params = {}
    for i in range(5):
        fan_in, fan_out = dims[i], dims[i + 1]
        bound = 1.0 / (fan_in ** 0.5)
        key, kw, kb = jax.random.split(key, 3)
        # stored as [in, out] so the kernel can do x @ W
        params[f"w{i + 1}"] = jax.random.uniform(
            kw, (fan_in, fan_out), jnp.float32, -bound, bound)
        params[f"b{i + 1}"] = jax.random.uniform(
            kb, (1, fan_out), jnp.float32, -bound, bound)
    for i in range(4):
        h = dims[i + 1]
        key, kg, kbt, km, kv = jax.random.split(key, 5)
        params[f"g{i + 1}"] = jax.random.uniform(kg, (1, h), jnp.float32, 0.8, 1.2)
        params[f"beta{i + 1}"] = jax.random.uniform(kbt, (1, h), jnp.float32, -0.1, 0.1)
        params[f"mean{i + 1}"] = jax.random.normal(km, (1, h), jnp.float32) * 0.1
        params[f"var{i + 1}"] = jax.random.uniform(kv, (1, h), jnp.float32, 0.5, 1.5)
    return params


def dnn_reference(x, params):
    """Plain-JAX f32 reference of the original PyTorch eval-mode forward."""
    B = x.shape[0]
    h = x.reshape(B, -1).astype(jnp.float32)
    for i in (1, 2, 3, 4):
        z = h @ params[f"w{i}"] + params[f"b{i}"]
        z = ((z - params[f"mean{i}"])
             * (params[f"g{i}"] / jnp.sqrt(params[f"var{i}"] + EPS))
             + params[f"beta{i}"])
        h = jnp.maximum(z, 0.0)
    return h @ params["w5"] + params["b5"]


def dnn_reference_matched(x, params, *, tb=None):
    """Plain-JAX reference using the SAME folding/padding/bf16 numerics as the kernel."""
    x_p, wbs, pdims, B, b_pad, _, n_output = _prepare(x, params, tb)
    act_dtype = _elementwise_dtype()
    h = x_p
    for li in range(5):
        w, b = wbs[2 * li], wbs[2 * li + 1]
        z = jnp.dot(h.astype(jnp.bfloat16), w, preferred_element_type=jnp.float32) + b
        h = jnp.maximum(z, 0.0).astype(act_dtype) if li < 4 else z
    return h[:B, :n_output]


# ---------------------------------------------------------------------------
if __name__ == "__main__":
    key = jax.random.PRNGKey(0)

    # Small shapes: batch=8, x = [8, 2, 4, 4] -> flattened feature dim 32.
    B, C, H, W = 8, 2, 4, 4
    n_feature, n_h1, n_h2, n_h3, n_h4, n_output = C * H * W, 64, 64, 32, 32, 8

    key, kx, kp = jax.random.split(key, 3)
    x = jax.random.normal(kx, (B, C, H, W), jnp.float32)
    params = init_params(kp, n_feature, n_h1, n_h2, n_h3, n_h4, n_output)

    out = jax.block_until_ready(dnn_forward(x, params))
    assert out.shape == (B, n_output)

    # Tight check vs. a numerics-matched reference (validates folding/padding/grid plumbing).
    ref_matched = dnn_reference_matched(x, params)
    assert jnp.allclose(out, ref_matched, atol=1e-3, rtol=1e-3), "mismatch vs matched ref"

    # Looser check vs. the exact f32 eval-mode forward (bf16 MXU / activation rounding).
    ref_f32 = dnn_reference(x, params)
    assert jnp.allclose(out, ref_f32, atol=1e-1, rtol=1e-1), "mismatch vs f32 ref"

    print("KERNEL_OK")
</pallas_src>

<mosaic_0001>
module attributes {stable_mosaic.version = 11 : i64} {
  func.func @dnn_kernel(%arg0: i32, %arg1: memref<8x32xbf16, #tpu.memory_space<vmem>>, %arg2: memref<32x64xbf16, #tpu.memory_space<vmem>>, %arg3: memref<1x64xf32, #tpu.memory_space<vmem>>, %arg4: memref<64x64xbf16, #tpu.memory_space<vmem>>, %arg5: memref<1x64xf32, #tpu.memory_space<vmem>>, %arg6: memref<64x32xbf16, #tpu.memory_space<vmem>>, %arg7: memref<1x32xf32, #tpu.memory_space<vmem>>, %arg8: memref<32x32xbf16, #tpu.memory_space<vmem>>, %arg9: memref<1x32xf32, #tpu.memory_space<vmem>>, %arg10: memref<32x128xbf16, #tpu.memory_space<vmem>>, %arg11: memref<1x128xf32, #tpu.memory_space<vmem>>, %arg12: memref<8x128xf32, #tpu.memory_space<vmem>>) attributes {dimension_semantics = [#tpu.dimension_semantics<parallel>], iteration_bounds = array<i64: 1>, scalar_prefetch = 0 : i64, scratch_operands = 0 : i64, tpu.core_type = #tpu.core_type<tc>, window_params = [{transform_indices = @transform_0, window_bounds = array<i64: 8, 32>}, {pipeline_mode = #tpu.pipeline_mode<synchronous>, transform_indices = @transform_1, window_bounds = array<i64: 32, 64>}, {pipeline_mode = #tpu.pipeline_mode<synchronous>, transform_indices = @transform_2, window_bounds = array<i64: 1, 64>}, {pipeline_mode = #tpu.pipeline_mode<synchronous>, transform_indices = @transform_3, window_bounds = array<i64: 64, 64>}, {pipeline_mode = #tpu.pipeline_mode<synchronous>, transform_indices = @transform_4, window_bounds = array<i64: 1, 64>}, {pipeline_mode = #tpu.pipeline_mode<synchronous>, transform_indices = @transform_5, window_bounds = array<i64: 64, 32>}, {pipeline_mode = #tpu.pipeline_mode<synchronous>, transform_indices = @transform_6, window_bounds = array<i64: 1, 32>}, {pipeline_mode = #tpu.pipeline_mode<synchronous>, transform_indices = @transform_7, window_bounds = array<i64: 32, 32>}, {pipeline_mode = #tpu.pipeline_mode<synchronous>, transform_indices = @transform_8, window_bounds = array<i64: 1, 32>}, {pipeline_mode = #tpu.pipeline_mode<synchronous>, transform_indices = @transform_9, window_bounds = array<i64: 32, 128>}, {pipeline_mode = #tpu.pipeline_mode<synchronous>, transform_indices = @transform_10, window_bounds = array<i64: 1, 128>}, {transform_indices = @transform_11, window_bounds = array<i64: 8, 128>}]} {
    %c0 = arith.constant 0 : index
    %c0_0 = arith.constant 0 : index
    %0 = vector.load %arg1[%c0, %c0_0] : memref<8x32xbf16, #tpu.memory_space<vmem>>, vector<8x32xbf16>
    %c0_1 = arith.constant 0 : index
    %c0_2 = arith.constant 0 : index
    %1 = vector.load %arg2[%c0_1, %c0_2] : memref<32x64xbf16, #tpu.memory_space<vmem>>, vector<32x64xbf16>
    %cst = arith.constant dense<0.000000e+00> : vector<8x64xf32>
    %2 = tpu.matmul %0, %1, %cst {dimension_numbers = #tpu.dot_dimension_numbers<[1], [0], [0], [1], [0, 0, 1, 1], [], []>} : vector<8x32xbf16>, vector<32x64xbf16>, vector<8x64xf32> -> vector<8x64xf32>
    %c0_3 = arith.constant 0 : index
    %c0_4 = arith.constant 0 : index
    %3 = vector.load %arg3[%c0_3, %c0_4] : memref<1x64xf32, #tpu.memory_space<vmem>>, vector<1x64xf32>
    %4 = vector.broadcast %3 : vector<1x64xf32> to vector<8x64xf32>
    %5 = arith.addf %2, %4 : vector<8x64xf32>
    %cst_5 = arith.constant 0.000000e+00 : f32
    %6 = vector.broadcast %cst_5 : f32 to vector<8x64xf32>
    %7 = arith.maximumf %5, %6 : vector<8x64xf32>
    %8 = arith.truncf %7 : vector<8x64xf32> to vector<8x64xbf16>
    %c0_6 = arith.constant 0 : index
    %c0_7 = arith.constant 0 : index
    %9 = vector.load %arg4[%c0_6, %c0_7] : memref<64x64xbf16, #tpu.memory_space<vmem>>, vector<64x64xbf16>
    %cst_8 = arith.constant dense<0.000000e+00> : vector<8x64xf32>
    %10 = tpu.matmul %8, %9, %cst_8 {dimension_numbers = #tpu.dot_dimension_numbers<[1], [0], [0], [1], [0, 0, 1, 1], [], []>} : vector<8x64xbf16>, vector<64x64xbf16>, vector<8x64xf32> -> vector<8x64xf32>
    %c0_9 = arith.constant 0 : index
    %c0_10 = arith.constant 0 : index
    %11 = vector.load %arg5[%c0_9, %c0_10] : memref<1x64xf32, #tpu.memory_space<vmem>>, vector<1x64xf32>
    %12 = vector.broadcast %11 : vector<1x64xf32> to vector<8x64xf32>
    %13 = arith.addf %10, %12 : vector<8x64xf32>
    %cst_11 = arith.constant 0.000000e+00 : f32
    %14 = vector.broadcast %cst_11 : f32 to vector<8x64xf32>
    %15 = arith.maximumf %13, %14 : vector<8x64xf32>
    %16 = arith.truncf %15 : vector<8x64xf32> to vector<8x64xbf16>
    %c0_12 = arith.constant 0 : index
    %c0_13 = arith.constant 0 : index
    %17 = vector.load %arg6[%c0_12, %c0_13] : memref<64x32xbf16, #tpu.memory_space<vmem>>, vector<64x32xbf16>
    %cst_14 = arith.constant dense<0.000000e+00> : vector<8x32xf32>
    %18 = tpu.matmul %16, %17, %cst_14 {dimension_numbers = #tpu.dot_dimension_numbers<[1], [0], [0], [1], [0, 0, 1, 1], [], []>} : vector<8x64xbf16>, vector<64x32xbf16>, vector<8x32xf32> -> vector<8x32xf32>
    %c0_15 = arith.constant 0 : index
    %c0_16 = arith.constant 0 : index
    %19 = vector.load %arg7[%c0_15, %c0_16] : memref<1x32xf32, #tpu.memory_space<vmem>>, vector<1x32xf32>
    %20 = vector.broadcast %19 : vector<1x32xf32> to vector<8x32xf32>
    %21 = arith.addf %18, %20 : vector<8x32xf32>
    %cst_17 = arith.constant 0.000000e+00 : f32
    %22 = vector.broadcast %cst_17 : f32 to vector<8x32xf32>
    %23 = arith.maximumf %21, %22 : vector<8x32xf32>
    %24 = arith.truncf %23 : vector<8x32xf32> to vector<8x32xbf16>
    %c0_18 = arith.constant 0 : index
    %c0_19 = arith.constant 0 : index
    %25 = vector.load %arg8[%c0_18, %c0_19] : memref<32x32xbf16, #tpu.memory_space<vmem>>, vector<32x32xbf16>
    %cst_20 = arith.constant dense<0.000000e+00> : vector<8x32xf32>
    %26 = tpu.matmul %24, %25, %cst_20 {dimension_numbers = #tpu.dot_dimension_numbers<[1], [0], [0], [1], [0, 0, 1, 1], [], []>} : vector<8x32xbf16>, vector<32x32xbf16>, vector<8x32xf32> -> vector<8x32xf32>
    %c0_21 = arith.constant 0 : index
    %c0_22 = arith.constant 0 : index
    %27 = vector.load %arg9[%c0_21, %c0_22] : memref<1x32xf32, #tpu.memory_space<vmem>>, vector<1x32xf32>
    %28 = vector.broadcast %27 : vector<1x32xf32> to vector<8x32xf32>
    %29 = arith.addf %26, %28 : vector<8x32xf32>
    %cst_23 = arith.constant 0.000000e+00 : f32
    %30 = vector.broadcast %cst_23 : f32 to vector<8x32xf32>
    %31 = arith.maximumf %29, %30 : vector<8x32xf32>
    %32 = arith.truncf %31 : vector<8x32xf32> to vector<8x32xbf16>
    %c0_24 = arith.constant 0 : index
    %c0_25 = arith.constant 0 : index
    %33 = vector.load %arg10[%c0_24, %c0_25] : memref<32x128xbf16, #tpu.memory_space<vmem>>, vector<32x128xbf16>
    %cst_26 = arith.constant dense<0.000000e+00> : vector<8x128xf32>
    %34 = tpu.matmul %32, %33, %cst_26 {dimension_numbers = #tpu.dot_dimension_numbers<[1], [0], [0], [1], [0, 0, 1, 1], [], []>} : vector<8x32xbf16>, vector<32x128xbf16>, vector<8x128xf32> -> vector<8x128xf32>
    %c0_27 = arith.constant 0 : index
    %c0_28 = arith.constant 0 : index
    %35 = vector.load %arg11[%c0_27, %c0_28] : memref<1x128xf32, #tpu.memory_space<vmem>>, vector<1x128xf32>
    %36 = vector.broadcast %35 : vector<1x128xf32> to vector<8x128xf32>
    %37 = arith.addf %34, %36 : vector<8x128xf32>
    %c0_29 = arith.constant 0 : index
    %c0_30 = arith.constant 0 : index
    %38 = vector.load %arg12[%c0_29, %c0_30] : memref<8x128xf32, #tpu.memory_space<vmem>>, vector<8x128xf32>
    tpu.vector_store %arg12[%c0_29, %c0_30], %37 {strides = array<i32>} : memref<8x128xf32, #tpu.memory_space<vmem>>, vector<8x128xf32>,
    return
  }
  func.func @transform_0(%arg0: i32) -> (i32, i32) {
    %c0_i32 = arith.constant 0 : i32
    %c0_i32_0 = arith.constant 0 : i32
    return %arg0, %c0_i32 : i32, i32
  }
  func.func @transform_1(%arg0: i32) -> (i32, i32) {
    %c0_i32 = arith.constant 0 : i32
    %c0_i32_0 = arith.constant 0 : i32
    %c0_i32_1 = arith.constant 0 : i32
    return %c0_i32, %c0_i32_0 : i32, i32
  }
  func.func @transform_2(%arg0: i32) -> (i32, i32) {
    %c0_i32 = arith.constant 0 : i32
    %c0_i32_0 = arith.constant 0 : i32
    %c0_i32_1 = arith.constant 0 : i32
    return %c0_i32, %c0_i32_0 : i32, i32
  }
  func.func @transform_3(%arg0: i32) -> (i32, i32) {
    %c0_i32 = arith.constant 0 : i32
    %c0_i32_0 = arith.constant 0 : i32
    %c0_i32_1 = arith.constant 0 : i32
    return %c0_i32, %c0_i32_0 : i32, i32
  }
  func.func @transform_4(%arg0: i32) -> (i32, i32) {
    %c0_i32 = arith.constant 0 : i32
    %c0_i32_0 = arith.constant 0 : i32
    %c0_i32_1 = arith.constant 0 : i32
    return %c0_i32, %c0_i32_0 : i32, i32
  }
  func.func @transform_5(%arg0: i32) -> (i32, i32) {
    %c0_i32 = arith.constant 0 : i32
    %c0_i32_0 = arith.constant 0 : i32
    %c0_i32_1 = arith.constant 0 : i32
    return %c0_i32, %c0_i32_0 : i32, i32
  }
  func.func @transform_6(%arg0: i32) -> (i32, i32) {
    %c0_i32 = arith.constant 0 : i32
    %c0_i32_0 = arith.constant 0 : i32
    %c0_i32_1 = arith.constant 0 : i32
    return %c0_i32, %c0_i32_0 : i32, i32
  }
  func.func @transform_7(%arg0: i32) -> (i32, i32) {
    %c0_i32 = arith.constant 0 : i32
    %c0_i32_0 = arith.constant 0 : i32
    %c0_i32_1 = arith.constant 0 : i32
    return %c0_i32, %c0_i32_0 : i32, i32
  }
  func.func @transform_8(%arg0: i32) -> (i32, i32) {
    %c0_i32 = arith.constant 0 : i32
    %c0_i32_0 = arith.constant 0 : i32
    %c0_i32_1 = arith.constant 0 : i32
    return %c0_i32, %c0_i32_0 : i32, i32
  }
  func.func @transform_9(%arg0: i32) -> (i32, i32) {
    %c0_i32 = arith.constant 0 : i32
    %c0_i32_0 = arith.constant 0 : i32
    %c0_i32_1 = arith.constant 0 : i32
    return %c0_i32, %c0_i32_0 : i32, i32
  }
  func.func @transform_10(%arg0: i32) -> (i32, i32) {
    %c0_i32 = arith.constant 0 : i32
    %c0_i32_0 = arith.constant 0 : i32
    %c0_i32_1 = arith.constant 0 : i32
    return %c0_i32, %c0_i32_0 : i32, i32
  }
  func.func @transform_11(%arg0: i32) -> (i32, i32) {
    %c0_i32 = arith.constant 0 : i32
    %c0_i32_0 = arith.constant 0 : i32
    return %arg0, %c0_i32 : i32, i32
  }
}

</mosaic_0001>

<llo_original>
// kernel: tpu_custom_call.1
$region0: #{tpu_custom_call.1}
  #allocation0 [shape = 'u32[]', space=smem, size = 0x4, offset = 0x4, fixed_abs, tag = 'smem constant byte address 0x4 - core index']
  #allocation1 [shape = 'u32[144,128]{1,0:T(1,128)}', space=vmem, size = 0x12000, scoped, tag = 'internal scratch']
  %s0 = inlined_call_operand.hbm [shape: bf16[8,32], index: 0, kind: input, shape index: {}]
  %s1 = inlined_call_operand.vmem [shape: bf16[32,64], index: 1, kind: input, shape index: {}]
  %s2 = inlined_call_operand.vmem [shape: f32[1,64], index: 2, kind: input, shape index: {}]
  %s3 = inlined_call_operand.vmem [shape: bf16[64,64], index: 3, kind: input, shape index: {}]
  %s4 = inlined_call_operand.vmem [shape: f32[1,64], index: 4, kind: input, shape index: {}]
  %s5 = inlined_call_operand.vmem [shape: bf16[64,32], index: 5, kind: input, shape index: {}]
  %s6 = inlined_call_operand.hbm [shape: f32[1,32], index: 6, kind: input, shape index: {}]
  %s7 = inlined_call_operand.hbm [shape: bf16[32,32], index: 7, kind: input, shape index: {}]
  %s8 = inlined_call_operand.hbm [shape: f32[1,32], index: 8, kind: input, shape index: {}]
  %s9 = inlined_call_operand.vmem [shape: bf16[32,128], index: 9, kind: input, shape index: {}]
  %s10 = inlined_call_operand.vmem [shape: f32[1,128], index: 10, kind: input, shape index: {}]
  %s11 = inlined_call_operand.hbm [shape: f32[8,128], index: 11, kind: output, shape index: {}]
  %s12 = sld [smem:[#allocation0]]
  $region70: #{tpu_custom_call.1} parent=0
    _
  %s14 = ssub.s32 1, %s12
  %s15 = scalar_select 0, %s14, %s12
  $region1: #{tpu_custom_call.1} parent=0
    #allocation2 [shape = 'u8[2048]{0}', space=vmem, size = 0x800, scoped, tag = 'input window, operand 0, single buffered']
    #allocation3 [shape = 's32[1]{0}', space=sflag, size = 0x4, scoped, tag = 'scoped memory for tpu_custom_call.1']
    #allocation4 [shape = 's32[1]{0}', space=sflag, size = 0x4, scoped, tag = 'scoped memory for tpu_custom_call.1']
    #allocation5 [shape = 'u8[512]{0}', space=vmem, size = 0x400, scoped, tag = 'input window, operand 6, single buffered']
    #allocation6 [shape = 's32[1]{0}', space=sflag, size = 0x4, scoped, tag = 'scoped memory for tpu_custom_call.1']
    #allocation7 [shape = 'u8[8192]{0}', space=vmem, size = 0x2000, scoped, tag = 'input window, operand 7, single buffered']
    #allocation8 [shape = 'u8[512]{0}', space=vmem, size = 0x400, scoped, tag = 'input window, operand 8, single buffered']
    #allocation9 [shape = 's32[1]{0}', space=sflag, size = 0x4, scoped, tag = 'scoped memory for tpu_custom_call.1']
    #allocation10 [shape = 'u8[4096]{0}', space=vmem, size = 0x1000, scoped, tag = 'output window, operand 0, single buffered']
    %16 = vsyncpa [#allocation3], 0
    %17 = vsyncpa [#allocation6], 0
    %18 = vsyncpa [#allocation9], 0
    %19 = vsyncpa [#allocation4], 0
    // Predicated region
    $region2: #{tpu_custom_call.1} parent=1 // pred_check
      _
    $region3: #{tpu_custom_call.1} parent=1 // pred_check_branch
      %21 = sbr.rel (0) target = $region5
    $region4: #{tpu_custom_call.1} parent=1 // pred_region
      %s23 = ssub.s32 64, 64
      %24 = vsyncadd [#allocation3], %s23
      %s26 = sshll.u32 [#allocation2], 4
      %s27 = int_to_ptr.vmem [resolvable:$true] %s26
      %29 = dma.hbm_to_vmem [thread:$0]  %s0, 64, %s27, [#allocation3]
    $region5: #{tpu_custom_call.1} parent=1 // pred_fallthru
      _
    // Predicated region
    $region6: #{tpu_custom_call.1} parent=1 // pred_check
      _
    $region7: #{tpu_custom_call.1} parent=1 // pred_check_branch
      %31 = sbr.rel (0) target = $region9
    $region8: #{tpu_custom_call.1} parent=1 // pred_region
      _
    $region9: #{tpu_custom_call.1} parent=1 // pred_fallthru
      _
    // Predicated region
    $region10: #{tpu_custom_call.1} parent=1 // pred_check
      _
    $region11: #{tpu_custom_call.1} parent=1 // pred_check_branch
      %33 = sbr.rel (0) target = $region13
    $region12: #{tpu_custom_call.1} parent=1 // pred_region
      _
    $region13: #{tpu_custom_call.1} parent=1 // pred_fallthru
      _
    // Predicated region
    $region14: #{tpu_custom_call.1} parent=1 // pred_check
      _
    $region15: #{tpu_custom_call.1} parent=1 // pred_check_branch
      %35 = sbr.rel (0) target = $region17
    $region16: #{tpu_custom_call.1} parent=1 // pred_region
      _
    $region17: #{tpu_custom_call.1} parent=1 // pred_fallthru
      _
    // Predicated region
    $region18: #{tpu_custom_call.1} parent=1 // pred_check
      _
    $region19: #{tpu_custom_call.1} parent=1 // pred_check_branch
      %37 = sbr.rel (0) target = $region21
    $region20: #{tpu_custom_call.1} parent=1 // pred_region
      _
    $region21: #{tpu_custom_call.1} parent=1 // pred_fallthru
      _
    // Predicated region
    $region22: #{tpu_custom_call.1} parent=1 // pred_check
      _
    $region23: #{tpu_custom_call.1} parent=1 // pred_check_branch
      %39 = sbr.rel (0) target = $region25
    $region24: #{tpu_custom_call.1} parent=1 // pred_region
      _
    $region25: #{tpu_custom_call.1} parent=1 // pred_fallthru
      _
    // Predicated region
    $region26: #{tpu_custom_call.1} parent=1 // pred_check
      _
    $region27: #{tpu_custom_call.1} parent=1 // pred_check_branch
      %41 = sbr.rel (0) target = $region29
    $region28: #{tpu_custom_call.1} parent=1 // pred_region
      %s43 = ssub.s32 16, 16
      %44 = vsyncadd [#allocation6], %s43
      %s46 = sshll.u32 [#allocation5], 4
      %s47 = int_to_ptr.vmem [resolvable:$true] %s46
      %49 = dma.hbm_to_vmem [thread:$0]  %s6, 16, %s47, [#allocation6]
    $region29: #{tpu_custom_call.1} parent=1 // pred_fallthru
      _
    // Predicated region
    $region30: #{tpu_custom_call.1} parent=1 // pred_check
      _
    $region31: #{tpu_custom_call.1} parent=1 // pred_check_branch
      %51 = sbr.rel (0) target = $region33
    $region32: #{tpu_custom_call.1} parent=1 // pred_region
      %s53 = ssub.s32 256, 256
      %54 = vsyncadd [#allocation6], %s53
      %s55 = sshll.u32 [#allocation7], 4
      %s56 = int_to_ptr.vmem [resolvable:$true] %s55
      %61 = dma.hbm_to_vmem [thread:$0]  %s7, 256, %s56, [#allocation6], 64, 64, 4
    $region33: #{tpu_custom_call.1} parent=1 // pred_fallthru
      _
    // Predicated region
    $region34: #{tpu_custom_call.1} parent=1 // pred_check
      _
    $region35: #{tpu_custom_call.1} parent=1 // pred_check_branch
      %63 = sbr.rel (0) target = $region37
    $region36: #{tpu_custom_call.1} parent=1 // pred_region
      %s65 = ssub.s32 16, 16
      %66 = vsyncadd [#allocation9], %s65
      %s68 = sshll.u32 [#allocation8], 4
      %s69 = int_to_ptr.vmem [resolvable:$true] %s68
      %71 = dma.hbm_to_vmem [thread:$0]  %s8, 16, %s69, [#allocation9]
    $region37: #{tpu_custom_call.1} parent=1 // pred_fallthru
      _
    // Predicated region
    $region38: #{tpu_custom_call.1} parent=1 // pred_check
      _
    $region39: #{tpu_custom_call.1} parent=1 // pred_check_branch
      %73 = sbr.rel (0) target = $region41
    $region40: #{tpu_custom_call.1} parent=1 // pred_region
      _
    $region41: #{tpu_custom_call.1} parent=1 // pred_fallthru
      _
    // Predicated region
    $region42: #{tpu_custom_call.1} parent=1 // pred_check
      _
    $region43: #{tpu_custom_call.1} parent=1 // pred_check_branch
      %75 = sbr.rel (0) target = $region45
    $region44: #{tpu_custom_call.1} parent=1 // pred_region
      _
    $region45: #{tpu_custom_call.1} parent=1 // pred_fallthru
      _
    // Predicated region
    $region46: #{tpu_custom_call.1} parent=1 // pred_check
      _
    $region47: #{tpu_custom_call.1} parent=1 // pred_check_branch
      %77 = sbr.rel (0) target = $region49
    $region48: #{tpu_custom_call.1} parent=1 // pred_region
      %78 = dma.done [#allocation3], 64
    $region49: #{tpu_custom_call.1} parent=1 // pred_fallthru
      _
    // Predicated region
    $region50: #{tpu_custom_call.1} parent=1 // pred_check
      _
    $region51: #{tpu_custom_call.1} parent=1 // pred_check_branch
      %80 = sbr.rel (0) target = $region53
    $region52: #{tpu_custom_call.1} parent=1 // pred_region
      %81 = dma.done [#allocation6], 16
    $region53: #{tpu_custom_call.1} parent=1 // pred_fallthru
      _
    // Predicated region
    $region54: #{tpu_custom_call.1} parent=1 // pred_check
      _
    $region55: #{tpu_custom_call.1} parent=1 // pred_check_branch
      %83 = sbr.rel (0) target = $region57
    $region56: #{tpu_custom_call.1} parent=1 // pred_region
      %84 = dma.done [#allocation6], 256
    $region57: #{tpu_custom_call.1} parent=1 // pred_fallthru
      _
    // Predicated region
    $region58: #{tpu_custom_call.1} parent=1 // pred_check
      _
    $region59: #{tpu_custom_call.1} parent=1 // pred_check_branch
      %86 = sbr.rel (0) target = $region61
    $region60: #{tpu_custom_call.1} parent=1 // pred_region
      %87 = dma.done [#allocation9], 16
    $region61: #{tpu_custom_call.1} parent=1 // pred_fallthru
      _
    %v89 = vld [vmem:[#allocation2] sm:$0xf]
    %v90 = vld [vmem:[%s1] sm:$0xf]
    %v91 = vld [vmem:[%s1 + $0x4] sm:$0xf]
    %v92 = vld [vmem:[%s1 + $0x8] sm:$0xf]
    %v93 = vld [vmem:[%s1 + $0xc] sm:$0xf]
    %v94 = vld [vmem:[%s2] sm:$0x1]
    %v96 = vlaneseq
    %v97 = vshrl.u32 %v96, 7
    %v98 = vsub.s32 0, %v97
    %v99 = vrot.slane %v94, %v98
    %v105 = vunpack.c.l.b16 %v90
    %v106 = vunpack.c.l.b16 %v91
    %v107 = vunpack.c.l.b16 %v92
    %v108 = vunpack.c.l.b16 %v93
    %v109 = vpack.c.b16 %v106, %v105
    %v110 = vpack.c.b16 %v108, %v107
    %vm113 = vcmask 261120
    %v115 = vsel %vm113, %v89, 0
    %117 = vmatprep.subr.bf16.mxu0 0
    %118 = vmatpush1.bf16.msra.mxu0 %v109
    %119 = vmatprep.subr.bf16.mxu0 0
    %120 = vmatpush1.bf16.msra.mxu0 %v110
    %121 = vmatprep.subr.bf16.mxu0 0
    %122 = vmatpush1.bf16.msra.mxu0 0
    %123 = vmatprep.subr.bf16.mxu0 0
    %124 = vmatpush1.bf16.msra.mxu0 0
    %125 = vmatprep.subr.bf16.mxu0 0
    %126 = vmatpush1.bf16.msra.mxu0 0
    %127 = vmatprep.subr.bf16.mxu0 0
    %128 = vmatpush1.bf16.msra.mxu0 0
    %129 = vmatprep.subr.bf16.mxu0 0
    %130 = vmatpush1.bf16.msra.mxu0 0
    %131 = vmatprep.subr.bf16.mxu0 0
    %132 = vmatpush1.bf16.msra.mxu0 0
    %133 = vmatprep.subr.bf16.mxu0 0
    %134 = vmatpush1.bf16.msra.mxu0 0
    %135 = vmatprep.subr.bf16.mxu0 0
    %136 = vmatpush1.bf16.msra.mxu0 0
    %137 = vmatprep.subr.bf16.mxu0 0
    %138 = vmatpush1.bf16.msra.mxu0 0
    %139 = vmatprep.subr.bf16.mxu0 0
    %140 = vmatpush1.bf16.msra.mxu0 0
    %141 = vmatprep.subr.bf16.mxu0 0
    %142 = vmatpush1.bf16.msra.mxu0 0
    %143 = vmatprep.subr.bf16.mxu0 0
    %144 = vmatpush1.bf16.msra.mxu0 0
    %145 = vmatprep.subr.bf16.mxu0 0
    %146 = vmatpush1.bf16.msra.mxu0 0
    %147 = vmatprep.subr.bf16.mxu0 0
    %148 = vmatpush1.bf16.msra.mxu0 0
    %149 = vmatprep.mubr.bf16.mxu0 0
    %150 = vmatmul.mubr.bf16.gmra.mrb[0].mxu0 %v115
    %v151 = vpop.f32.mrb[0].mxu0
    %v152 = vadd.f32 %v99, %v151
    %v153 = vpop.f32.mrb[0].mxu0
    %v154 = vpop.f32.mrb[0].mxu0
    %v155 = vpop.f32.mrb[0].mxu0
    %156 = vdwg.mxu0
    %v157 = vmax.f32 %v152, 0.0
    %v158 = vpack.c.bf16 %v157, %v157
    %v159 = vld [vmem:[%s3] sm:$0xf]
    %v160 = vld [vmem:[%s3 + $0x4] sm:$0xf]
    %v161 = vld [vmem:[%s3 + $0x8] sm:$0xf]
    %v162 = vld [vmem:[%s3 + $0xc] sm:$0xf]
    %v163 = vld [vmem:[%s3 + $0x10] sm:$0xf]
    %v164 = vld [vmem:[%s3 + $0x14] sm:$0xf]
    %v165 = vld [vmem:[%s3 + $0x18] sm:$0xf]
    %v166 = vld [vmem:[%s3 + $0x1c] sm:$0xf]
    %v167 = vld [vmem:[%s4] sm:$0x1]
    %v169 = vlaneseq
    %v170 = vshrl.u32 %v169, 7
    %v171 = vsub.s32 0, %v170
    %v172 = vrot.slane %v167, %v171
    %v182 = vunpack.c.l.b16 %v159
    %v183 = vunpack.c.l.b16 %v160
    %v184 = vunpack.c.l.b16 %v161
    %v185 = vunpack.c.l.b16 %v162
    %v186 = vunpack.c.l.b16 %v163
    %v187 = vunpack.c.l.b16 %v164
    %v188 = vunpack.c.l.b16 %v165
    %v189 = vunpack.c.l.b16 %v166
    %v190 = vpack.c.b16 %v183, %v182
    %v191 = vpack.c.b16 %v185, %v184
    %v192 = vpack.c.b16 %v187, %v186
    %v193 = vpack.c.b16 %v189, %v188
    %vm198 = vcmask 523264
    %v200 = vsel %vm198, %v158, 0
    %202 = vmatprep.subr.bf16.mxu0 0
    %203 = vmatpush1.bf16.msra.mxu0 %v190
    %204 = vmatprep.subr.bf16.mxu0 0
    %205 = vmatpush1.bf16.msra.mxu0 %v191
    %206 = vmatprep.subr.bf16.mxu0 0
    %207 = vmatpush1.bf16.msra.mxu0 %v192
    %208 = vmatprep.subr.bf16.mxu0 0
    %209 = vmatpush1.bf16.msra.mxu0 %v193
    %210 = vmatprep.subr.bf16.mxu0 0
    %211 = vmatpush1.bf16.msra.mxu0 0
    %212 = vmatprep.subr.bf16.mxu0 0
    %213 = vmatpush1.bf16.msra.mxu0 0
    %214 = vmatprep.subr.bf16.mxu0 0
    %215 = vmatpush1.bf16.msra.mxu0 0
    %216 = vmatprep.subr.bf16.mxu0 0
    %217 = vmatpush1.bf16.msra.mxu0 0
    %218 = vmatprep.subr.bf16.mxu0 0
    %219 = vmatpush1.bf16.msra.mxu0 0
    %220 = vmatprep.subr.bf16.mxu0 0
    %221 = vmatpush1.bf16.msra.mxu0 0
    %222 = vmatprep.subr.bf16.mxu0 0
    %223 = vmatpush1.bf16.msra.mxu0 0
    %224 = vmatprep.subr.bf16.mxu0 0
    %225 = vmatpush1.bf16.msra.mxu0 0
    %226 = vmatprep.subr.bf16.mxu0 0
    %227 = vmatpush1.bf16.msra.mxu0 0
    %228 = vmatprep.subr.bf16.mxu0 0
    %229 = vmatpush1.bf16.msra.mxu0 0
    %230 = vmatprep.subr.bf16.mxu0 0
    %231 = vmatpush1.bf16.msra.mxu0 0
    %232 = vmatprep.subr.bf16.mxu0 0
    %233 = vmatpush1.bf16.msra.mxu0 0
    %234 = vmatprep.mubr.bf16.mxu0 0
    %235 = vmatmul.mubr.bf16.gmra.mrb[0].mxu0 %v200
    %v236 = vpop.f32.mrb[0].mxu0
    %v237 = vadd.f32 %v172, %v236
    %v238 = vpop.f32.mrb[0].mxu0
    %v239 = vpop.f32.mrb[0].mxu0
    %v240 = vpop.f32.mrb[0].mxu0
    %241 = vdwg.mxu0
    %v242 = vmax.f32 %v237, 0.0
    %v243 = vpack.c.bf16 %v242, %v242
    %v244 = vld [vmem:[%s5] sm:$0xf]
    %v245 = vld [vmem:[%s5 + $0x4] sm:$0xf]
    %v246 = vld [vmem:[%s5 + $0x8] sm:$0xf]
    %v247 = vld [vmem:[%s5 + $0xc] sm:$0xf]
    %v248 = vld [vmem:[%s5 + $0x10] sm:$0xf]
    %v249 = vld [vmem:[%s5 + $0x14] sm:$0xf]
    %v250 = vld [vmem:[%s5 + $0x18] sm:$0xf]
    %v251 = vld [vmem:[%s5 + $0x1c] sm:$0xf]
    %v252 = vld [vmem:[#allocation5] sm:$0x1]
    %v254 = vlaneseq
    %v255 = vshrl.u32 %v254, 7
    %v256 = vsub.s32 0, %v255
    %v257 = vrot.slane %v252, %v256
    %v267 = vunpack.c.l.b16 %v244
    %v268 = vunpack.c.l.b16 %v245
    %v269 = vunpack.c.l.b16 %v246
    %v270 = vunpack.c.l.b16 %v247
    %v271 = vunpack.c.l.b16 %v248
    %v272 = vunpack.c.l.b16 %v249
    %v273 = vunpack.c.l.b16 %v250
    %v274 = vunpack.c.l.b16 %v251
    %v275 = vpack.c.b16 %v268, %v267
    %v276 = vpack.c.b16 %v270, %v269
    %v277 = vpack.c.b16 %v272, %v271
    %v278 = vpack.c.b16 %v274, %v273
    %v284 = vsel %vm198, %v243, 0
    %286 = vmatprep.subr.bf16.mxu0 0
    %287 = vmatpush1.bf16.msra.mxu0 %v275
    %288 = vmatprep.subr.bf16.mxu0 0
    %289 = vmatpush1.bf16.msra.mxu0 %v276
    %290 = vmatprep.subr.bf16.mxu0 0
    %291 = vmatpush1.bf16.msra.mxu0 %v277
    %292 = vmatprep.subr.bf16.mxu0 0
    %293 = vmatpush1.bf16.msra.mxu0 %v278
    %294 = vmatprep.subr.bf16.mxu0 0
    %295 = vmatpush1.bf16.msra.mxu0 0
    %296 = vmatprep.subr.bf16.mxu0 0
    %297 = vmatpush1.bf16.msra.mxu0 0
    %298 = vmatprep.subr.bf16.mxu0 0
    %299 = vmatpush1.bf16.msra.mxu0 0
    %300 = vmatprep.subr.bf16.mxu0 0
    %301 = vmatpush1.bf16.msra.mxu0 0
    %302 = vmatprep.subr.bf16.mxu0 0
    %303 = vmatpush1.bf16.msra.mxu0 0
    %304 = vmatprep.subr.bf16.mxu0 0
    %305 = vmatpush1.bf16.msra.mxu0 0
    %306 = vmatprep.subr.bf16.mxu0 0
    %307 = vmatpush1.bf16.msra.mxu0 0
    %308 = vmatprep.subr.bf16.mxu0 0
    %309 = vmatpush1.bf16.msra.mxu0 0
    %310 = vmatprep.subr.bf16.mxu0 0
    %311 = vmatpush1.bf16.msra.mxu0 0
    %312 = vmatprep.subr.bf16.mxu0 0
    %313 = vmatpush1.bf16.msra.mxu0 0
    %314 = vmatprep.subr.bf16.mxu0 0
    %315 = vmatpush1.bf16.msra.mxu0 0
    %316 = vmatprep.subr.bf16.mxu0 0
    %317 = vmatpush1.bf16.msra.mxu0 0
    %318 = vmatprep.mubr.bf16.mxu0 0
    %319 = vmatmul.mubr.bf16.gmra.mrb[0].mxu0 %v284
    %v320 = vpop.f32.mrb[0].mxu0
    %v321 = vadd.f32 %v257, %v320
    %v322 = vpop.f32.mrb[0].mxu0
    %v323 = vpop.f32.mrb[0].mxu0
    %v324 = vpop.f32.mrb[0].mxu0
    %325 = vdwg.mxu0
    %v326 = vmax.f32 %v321, 0.0
    %v327 = vpack.c.bf16 %v326, %v326
    %v328 = vld [vmem:[#allocation7] sm:$0xf]
    %v329 = vld [vmem:[#allocation7 + $0x4] sm:$0xf]
    %v330 = vld [vmem:[#allocation7 + $0x8] sm:$0xf]
    %v331 = vld [vmem:[#allocation7 + $0xc] sm:$0xf]
    %v332 = vld [vmem:[#allocation8] sm:$0x1]
    %v334 = vlaneseq
    %v335 = vshrl.u32 %v334, 7
    %v336 = vsub.s32 0, %v335
    %v337 = vrot.slane %v332, %v336
    %v343 = vunpack.c.l.b16 %v328
    %v344 = vunpack.c.l.b16 %v329
    %v345 = vunpack.c.l.b16 %v330
    %v346 = vunpack.c.l.b16 %v331
    %v347 = vpack.c.b16 %v344, %v343
    %v348 = vpack.c.b16 %v346, %v345
    %v352 = vsel %vm113, %v327, 0
    %354 = vmatprep.subr.bf16.mxu0 0
    %355 = vmatpush1.bf16.msra.mxu0 %v347
    %356 = vmatprep.subr.bf16.mxu0 0
    %357 = vmatpush1.bf16.msra.mxu0 %v348
    %358 = vmatprep.subr.bf16.mxu0 0
    %359 = vmatpush1.bf16.msra.mxu0 0
    %360 = vmatprep.subr.bf16.mxu0 0
    %361 = vmatpush1.bf16.msra.mxu0 0
    %362 = vmatprep.subr.bf16.mxu0 0
    %363 = vmatpush1.bf16.msra.mxu0 0
    %364 = vmatprep.subr.bf16.mxu0 0
    %365 = vmatpush1.bf16.msra.mxu0 0
    %366 = vmatprep.subr.bf16.mxu0 0
    %367 = vmatpush1.bf16.msra.mxu0 0
    %368 = vmatprep.subr.bf16.mxu0 0
    %369 = vmatpush1.bf16.msra.mxu0 0
    %370 = vmatprep.subr.bf16.mxu0 0
    %371 = vmatpush1.bf16.msra.mxu0 0
    %372 = vmatprep.subr.bf16.mxu0 0
    %373 = vmatpush1.bf16.msra.mxu0 0
    %374 = vmatprep.subr.bf16.mxu0 0
    %375 = vmatpush1.bf16.msra.mxu0 0
    %376 = vmatprep.subr.bf16.mxu0 0
    %377 = vmatpush1.bf16.msra.mxu0 0
    %378 = vmatprep.subr.bf16.mxu0 0
    %379 = vmatpush1.bf16.msra.mxu0 0
    %380 = vmatprep.subr.bf16.mxu0 0
    %381 = vmatpush1.bf16.msra.mxu0 0
    %382 = vmatprep.subr.bf16.mxu0 0
    %383 = vmatpush1.bf16.msra.mxu0 0
    %384 = vmatprep.subr.bf16.mxu0 0
    %385 = vmatpush1.bf16.msra.mxu0 0
    %386 = vmatprep.mubr.bf16.mxu0 0
    %387 = vmatmul.mubr.bf16.gmra.mrb[0].mxu0 %v352
    %v388 = vpop.f32.mrb[0].mxu0
    %v389 = vadd.f32 %v337, %v388
    %v390 = vpop.f32.mrb[0].mxu0
    %v391 = vpop.f32.mrb[0].mxu0
    %v392 = vpop.f32.mrb[0].mxu0
    %393 = vdwg.mxu0
    %v394 = vmax.f32 %v389, 0.0
    %v395 = vpack.c.bf16 %v394, %v394
    %v396 = vld [vmem:[%s9] sm:$0xf]
    %v397 = vld [vmem:[%s9 + $0x4] sm:$0xf]
    %v398 = vld [vmem:[%s9 + $0x8] sm:$0xf]
    %v399 = vld [vmem:[%s9 + $0xc] sm:$0xf]
    %v400 = vld [vmem:[%s10] sm:$0x1]
    %v402 = vlaneseq
    %v403 = vshrl.u32 %v402, 7
    %v404 = vsub.s32 0, %v403
    %v405 = vrot.slane %v400, %v404
    %v411 = vunpack.c.l.b16 %v396
    %v412 = vunpack.c.l.b16 %v397
    %v413 = vunpack.c.l.b16 %v398
    %v414 = vunpack.c.l.b16 %v399
    %v415 = vpack.c.b16 %v412, %v411
    %v416 = vpack.c.b16 %v414, %v413
    %v420 = vsel %vm113, %v395, 0
    %422 = vmatprep.subr.bf16.mxu0 0
    %423 = vmatpush1.bf16.msra.mxu0 %v415
    %424 = vmatprep.subr.bf16.mxu0 0
    %425 = vmatpush1.bf16.msra.mxu0 %v416
    %426 = vmatprep.subr.bf16.mxu0 0
    %427 = vmatpush1.bf16.msra.mxu0 0
    %428 = vmatprep.subr.bf16.mxu0 0
    %429 = vmatpush1.bf16.msra.mxu0 0
    %430 = vmatprep.subr.bf16.mxu0 0
    %431 = vmatpush1.bf16.msra.mxu0 0
    %432 = vmatprep.subr.bf16.mxu0 0
    %433 = vmatpush1.bf16.msra.mxu0 0
    %434 = vmatprep.subr.bf16.mxu0 0
    %435 = vmatpush1.bf16.msra.mxu0 0
    %436 = vmatprep.subr.bf16.mxu0 0
    %437 = vmatpush1.bf16.msra.mxu0 0
    %438 = vmatprep.subr.bf16.mxu0 0
    %439 = vmatpush1.bf16.msra.mxu0 0
    %440 = vmatprep.subr.bf16.mxu0 0
    %441 = vmatpush1.bf16.msra.mxu0 0
    %442 = vmatprep.subr.bf16.mxu0 0
    %443 = vmatpush1.bf16.msra.mxu0 0
    %444 = vmatprep.subr.bf16.mxu0 0
    %445 = vmatpush1.bf16.msra.mxu0 0
    %446 = vmatprep.subr.bf16.mxu0 0
    %447 = vmatpush1.bf16.msra.mxu0 0
    %448 = vmatprep.subr.bf16.mxu0 0
    %449 = vmatpush1.bf16.msra.mxu0 0
    %450 = vmatprep.subr.bf16.mxu0 0
    %451 = vmatpush1.bf16.msra.mxu0 0
    %452 = vmatprep.subr.bf16.mxu0 0
    %453 = vmatpush1.bf16.msra.mxu0 0
    %454 = vmatprep.mubr.bf16.mxu0 0
    %455 = vmatmul.mubr.bf16.gmra.mrb[0].mxu0 %v420
    %v456 = vpop.f32.mrb[0].mxu0
    %v457 = vadd.f32 %v405, %v456
    %v458 = vpop.f32.mrb[0].mxu0
    %v459 = vpop.f32.mrb[0].mxu0
    %v460 = vpop.f32.mrb[0].mxu0
    %461 = vdwg.mxu0
    %462 = vst [vmem:[#allocation10] sm:$0xff] %v457
    // Predicated region
    $region62: #{tpu_custom_call.1} parent=1 // pred_check
      _
    $region63: #{tpu_custom_call.1} parent=1 // pred_check_branch
      %464 = sbr.rel (0) target = $region65
    $region64: #{tpu_custom_call.1} parent=1 // pred_region
      %s466 = ssub.s32 128, 128
      %467 = vsyncadd [#allocation4], %s466
      %s469 = sshll.u32 [#allocation10], 4
      %s470 = int_to_ptr.vmem [resolvable:$true] %s469
      %472 = dma.vmem_to_hbm [thread:$0]  %s470, 128, %s11, [#allocation4]
    $region65: #{tpu_custom_call.1} parent=1 // pred_fallthru
      _
    // Predicated region
    $region66: #{tpu_custom_call.1} parent=1 // pred_check
      _
    $region67: #{tpu_custom_call.1} parent=1 // pred_check_branch
      %474 = sbr.rel (0) target = $region69
    $region68: #{tpu_custom_call.1} parent=1 // pred_region
      %475 = dma.done [#allocation4], 128
    $region69: #{tpu_custom_call.1} parent=1 // pred_fallthru
      _
    %476 = vsyncpa [#allocation3], 1
    %477 = vsyncpa [#allocation6], 1
    %478 = vsyncpa [#allocation9], 1
    %479 = vsyncpa [#allocation4], 1

</llo_original>
